<compile_context>
chip_gen: v5e
topology: v5e:2x2
jax: 0.10.0
libtpu: 0.0.40
codegen_flags: <defaults>
</compile_context>

<pallas_src>
import math

import jax
import jax.numpy as jnp
from jax.experimental import pallas as pl
from jax.experimental.pallas import tpu as pltpu


def _bias_kernel(x_ref, b_ref, o_ref):
    # One VPU add per vreg; the (1, C) bias Ref sublane-broadcasts for free.
    # The binding resource is HBM DMA, not VALU/vst.
    o_ref[...] = (x_ref[...] + b_ref[...]).astype(o_ref.dtype)


def _round_up(n: int, m: int) -> int:
    return ((n + m - 1) // m) * m


def bias_forward(x: jax.Array, bias: jax.Array, *,
                 target_block_bytes: int = 2 * 1024 * 1024) -> jax.Array:
    """Computes x + bias where the 1-D bias broadcasts over x's last axis."""
    size = bias.shape[-1]
    assert x.shape[-1] == size, "bias size must match last dim of x"
    orig_shape = x.shape
    out_dtype = jnp.result_type(x.dtype, bias.dtype)
    n_elems = x.size

    # ---- choose a lane-dense 2-D layout (rows, C) -------------------------
    # C must be a multiple of `size` (so a tiled bias broadcasts per row) and
    # ideally a multiple of 128 (full lanes, unmasked stores).  The fold is a
    # row-major reshape, i.e. a free view.
    lcm = size * 128 // math.gcd(size, 128)
    if n_elems % lcm == 0:
        C = lcm
        while C < 512 and n_elems % (C * 2) == 0:   # grow toward >=512 lanes
            C *= 2
        reps = C // size
        b_row = jnp.tile(bias, reps) if reps > 1 else bias
    else:
        # Fallback: natural (rows, size) layout; last block dim == full array
        # dim so the (8,128) tiling rule is still satisfied.
        C = size
        b_row = bias

    rows = n_elems // C
    x2d = x.reshape(rows, C)
    b2d = b_row.reshape(1, C)

    # ---- row tile: ~target_block_bytes per buffer, multiple of 8 ----------
    itemsize = jnp.dtype(x.dtype).itemsize
    tm = max(8, (target_block_bytes // (C * itemsize)) // 8 * 8)
    tm = min(tm, _round_up(rows, 8))
    # keep >= 2 grid steps when there is enough work, so a v7x chip can shard
    # the parallel axis across both TensorCores (no effect on v5e/v6e).
    if rows > 16 and pl.cdiv(rows, tm) < 2:
        tm = max(8, _round_up(pl.cdiv(rows, 2), 8))

    grid = (pl.cdiv(rows, tm),)   # ragged final block handled by the pipeline

    out = pl.pallas_call(
        _bias_kernel,
        out_shape=jax.ShapeDtypeStruct((rows, C), out_dtype),
        grid_spec=pltpu.PrefetchScalarGridSpec(
            num_scalar_prefetch=0,
            grid=grid,
            in_specs=[
                pl.BlockSpec((tm, C), lambda i: (i, 0)),
                pl.BlockSpec((1, C), lambda i: (0, 0)),
            ],
            out_specs=pl.BlockSpec((tm, C), lambda i: (i, 0)),
        ),
        compiler_params=pltpu.CompilerParams(
            dimension_semantics=("parallel",),
        ),
    )(x2d, b2d)

    return out.reshape(orig_shape)


if __name__ == "__main__":
    key = jax.random.PRNGKey(0)
    k_x, k_b, k_x2 = jax.random.split(key, 3)

    # --- case 1: module-faithful (bias zero-initialized), size=32 ----------
    size = 32
    bias_zero = jnp.zeros((size,), dtype=jnp.float32)          # reset_parameters
    x = jax.random.normal(k_x, (4, 64, size), dtype=jnp.float32)
    y = jax.block_until_ready(bias_forward(x, bias_zero))
    assert y.shape == x.shape and y.dtype == x.dtype
    assert jnp.allclose(y, x + bias_zero, atol=1e-6)

    # --- case 2: nonzero bias, lane-dense path ------------------------------
    bias_rand = jax.random.normal(k_b, (size,), dtype=jnp.float32)
    y2 = jax.block_until_ready(bias_forward(x, bias_rand))
    assert jnp.allclose(y2, x + bias_rand, atol=1e-6)

    # --- case 3: fallback (non-lane-dense) path + ragged final block -------
    size3 = 48
    x3 = jax.random.normal(k_x2, (2, 5, size3), dtype=jnp.float32)
    b3 = jax.random.normal(k_b, (size3,), dtype=jnp.float32)
    y3 = jax.block_until_ready(bias_forward(x3, b3))
    assert jnp.allclose(y3, x3 + b3, atol=1e-6)

    print("KERNEL_OK")
</pallas_src>

<mosaic_0001>
module attributes {stable_mosaic.version = 11 : i64} {
  func.func @_bias_kernel(%arg0: i32, %arg1: memref<16x512xf32, #tpu.memory_space<vmem>>, %arg2: memref<1x512xf32, #tpu.memory_space<vmem>>, %arg3: memref<16x512xf32, #tpu.memory_space<vmem>>) attributes {dimension_semantics = [#tpu.dimension_semantics<parallel>], iteration_bounds = array<i64: 1>, scalar_prefetch = 0 : i64, scratch_operands = 0 : i64, tpu.core_type = #tpu.core_type<tc>, window_params = [{transform_indices = @transform_0, window_bounds = array<i64: 16, 512>}, {pipeline_mode = #tpu.pipeline_mode<synchronous>, transform_indices = @transform_1, window_bounds = array<i64: 1, 512>}, {transform_indices = @transform_2, window_bounds = array<i64: 16, 512>}]} {
    %c0 = arith.constant 0 : index
    %c0_0 = arith.constant 0 : index
    %0 = vector.load %arg1[%c0, %c0_0] : memref<16x512xf32, #tpu.memory_space<vmem>>, vector<16x512xf32>
    %c0_1 = arith.constant 0 : index
    %c0_2 = arith.constant 0 : index
    %1 = vector.load %arg2[%c0_1, %c0_2] : memref<1x512xf32, #tpu.memory_space<vmem>>, vector<1x512xf32>
    %2 = vector.broadcast %1 : vector<1x512xf32> to vector<16x512xf32>
    %3 = arith.addf %0, %2 : vector<16x512xf32>
    %c0_3 = arith.constant 0 : index
    %c0_4 = arith.constant 0 : index
    %4 = vector.load %arg3[%c0_3, %c0_4] : memref<16x512xf32, #tpu.memory_space<vmem>>, vector<16x512xf32>
    tpu.vector_store %arg3[%c0_3, %c0_4], %3 {strides = array<i32>} : memref<16x512xf32, #tpu.memory_space<vmem>>, vector<16x512xf32>,
    return
  }
  func.func @transform_0(%arg0: i32) -> (i32, i32) {
    %c0_i32 = arith.constant 0 : i32
    %c0_i32_0 = arith.constant 0 : i32
    return %arg0, %c0_i32 : i32, i32
  }
  func.func @transform_1(%arg0: i32) -> (i32, i32) {
    %c0_i32 = arith.constant 0 : i32
    %c0_i32_0 = arith.constant 0 : i32
    %c0_i32_1 = arith.constant 0 : i32
    return %c0_i32, %c0_i32_0 : i32, i32
  }
  func.func @transform_2(%arg0: i32) -> (i32, i32) {
    %c0_i32 = arith.constant 0 : i32
    %c0_i32_0 = arith.constant 0 : i32
    return %arg0, %c0_i32 : i32, i32
  }
}

</mosaic_0001>

<llo_original>
// kernel: tpu_custom_call.1
$region0: #{tpu_custom_call.1}
  #allocation0 [shape = 'u32[]', space=smem, size = 0x4, offset = 0x4, fixed_abs, tag = 'smem constant byte address 0x4 - core index']
  #allocation1 [shape = 'u32[72,128]{1,0:T(1,128)}', space=vmem, size = 0x9000, scoped, tag = 'internal scratch']
  %s0 = inlined_call_operand.hbm [shape: f32[16,512], index: 0, kind: input, shape index: {}]
  %s1 = inlined_call_operand.hbm [shape: f32[1,512], index: 1, kind: input, shape index: {}]
  %s2 = inlined_call_operand.hbm [shape: f32[16,512], index: 2, kind: output, shape index: {}]
  %s3 = sld [smem:[#allocation0]]
  $region26: #{tpu_custom_call.1} parent=0
    _
  %s5 = ssub.s32 1, %s3
  %s6 = scalar_select 0, %s5, %s3
  $region1: #{tpu_custom_call.1} parent=0
    #allocation2 [shape = 'u8[32768]{0}', space=vmem, size = 0x8000, scoped, tag = 'input window, operand 0, single buffered']
    #allocation3 [shape = 's32[1]{0}', space=sflag, size = 0x4, scoped, tag = 'scoped memory for tpu_custom_call.1']
    #allocation4 [shape = 's32[1]{0}', space=sflag, size = 0x4, scoped, tag = 'scoped memory for tpu_custom_call.1']
    #allocation5 [shape = 'u8[2048]{0}', space=vmem, size = 0x800, scoped, tag = 'input window, operand 1, single buffered']
    #allocation6 [shape = 's32[1]{0}', space=sflag, size = 0x4, scoped, tag = 'scoped memory for tpu_custom_call.1']
    #allocation7 [shape = 'u8[32768]{0}', space=vmem, size = 0x8000, scoped, tag = 'output window, operand 0, single buffered']
    %7 = vsyncpa [#allocation3], 0
    %8 = vsyncpa [#allocation6], 0
    %9 = vsyncpa [#allocation4], 0
    // Predicated region
    $region2: #{tpu_custom_call.1} parent=1 // pred_check
      _
    $region3: #{tpu_custom_call.1} parent=1 // pred_check_branch
      %11 = sbr.rel (0) target = $region5
    $region4: #{tpu_custom_call.1} parent=1 // pred_region
      %13 = vsyncadd [#allocation3], 0
      %s14 = sshll.u32 %s0, 4
      %s15 = int_to_ptr.hbm [resolvable:$true] %s14
      %s16 = sshll.u32 [#allocation2], 4
      %s17 = int_to_ptr.vmem [resolvable:$true] %s16
      %22 = dma.hbm_to_vmem [thread:$0]  %s15, 1024, %s17, [#allocation3], 512, 512, 32
    $region5: #{tpu_custom_call.1} parent=1 // pred_fallthru
      _
    // Predicated region
    $region6: #{tpu_custom_call.1} parent=1 // pred_check
      _
    $region7: #{tpu_custom_call.1} parent=1 // pred_check_branch
      %24 = sbr.rel (0) target = $region9
    $region8: #{tpu_custom_call.1} parent=1 // pred_region
      %26 = vsyncadd [#allocation6], 0
      %s28 = sshll.u32 %s1, 4
      %s29 = int_to_ptr.hbm [resolvable:$true] %s28
      %s30 = sshll.u32 [#allocation5], 4
      %s31 = int_to_ptr.vmem [resolvable:$true] %s30
      %33 = dma.hbm_to_vmem [thread:$0]  %s29, 64, %s31, [#allocation6]
    $region9: #{tpu_custom_call.1} parent=1 // pred_fallthru
      _
    // Predicated region
    $region10: #{tpu_custom_call.1} parent=1 // pred_check
      _
    $region11: #{tpu_custom_call.1} parent=1 // pred_check_branch
      %35 = sbr.rel (0) target = $region13
    $region12: #{tpu_custom_call.1} parent=1 // pred_region
      %37 = dma.done [#allocation3], 1024
    $region13: #{tpu_custom_call.1} parent=1 // pred_fallthru
      _
    // Predicated region
    $region14: #{tpu_custom_call.1} parent=1 // pred_check
      _
    $region15: #{tpu_custom_call.1} parent=1 // pred_check_branch
      %39 = sbr.rel (0) target = $region17
    $region16: #{tpu_custom_call.1} parent=1 // pred_region
      %41 = dma.done [#allocation6], 64
    $region17: #{tpu_custom_call.1} parent=1 // pred_fallthru
      _
    %v42 = vld [vmem:[#allocation2] sm:$0xff]
    %v43 = vld [vmem:[#allocation2 + $0x8] sm:$0xff]
    %v44 = vld [vmem:[#allocation2 + $0x10] sm:$0xff]
    %v45 = vld [vmem:[#allocation2 + $0x18] sm:$0xff]
    %v46 = vld [vmem:[#allocation2 + $0x20] sm:$0xff]
    %v47 = vld [vmem:[#allocation2 + $0x28] sm:$0xff]
    %v48 = vld [vmem:[#allocation2 + $0x30] sm:$0xff]
    %v49 = vld [vmem:[#allocation2 + $0x38] sm:$0xff]
    %v50 = vld [vmem:[#allocation5] sm:$0xf]
    %v52 = vperm.slane %v50, 0
    %v53 = vperm.slane %v50, 1
    %v54 = vperm.slane %v50, 2
    %v55 = vperm.slane %v50, 3
    %v60 = vadd.f32 %v42, %v52
    %v61 = vadd.f32 %v43, %v53
    %v62 = vadd.f32 %v44, %v54
    %v63 = vadd.f32 %v45, %v55
    %v64 = vadd.f32 %v46, %v52
    %v65 = vadd.f32 %v47, %v53
    %v66 = vadd.f32 %v48, %v54
    %v67 = vadd.f32 %v49, %v55
    %68 = vst [vmem:[#allocation7] sm:$0xff] %v60
    %69 = vst [vmem:[#allocation7 + $0x8] sm:$0xff] %v61
    %70 = vst [vmem:[#allocation7 + $0x10] sm:$0xff] %v62
    %71 = vst [vmem:[#allocation7 + $0x18] sm:$0xff] %v63
    %72 = vst [vmem:[#allocation7 + $0x20] sm:$0xff] %v64
    %73 = vst [vmem:[#allocation7 + $0x28] sm:$0xff] %v65
    %74 = vst [vmem:[#allocation7 + $0x30] sm:$0xff] %v66
    %75 = vst [vmem:[#allocation7 + $0x38] sm:$0xff] %v67
    // Predicated region
    $region18: #{tpu_custom_call.1} parent=1 // pred_check
      _
    $region19: #{tpu_custom_call.1} parent=1 // pred_check_branch
      %77 = sbr.rel (0) target = $region21
    $region20: #{tpu_custom_call.1} parent=1 // pred_region
      %79 = vsyncadd [#allocation4], 0
      %s80 = sshll.u32 [#allocation7], 4
      %s81 = int_to_ptr.vmem [resolvable:$true] %s80
      %s82 = sshll.u32 %s2, 4
      %s83 = int_to_ptr.hbm [resolvable:$true] %s82
      %88 = dma.vmem_to_hbm [thread:$0]  %s81, 1024, %s83, [#allocation4], 512, 512, 32
    $region21: #{tpu_custom_call.1} parent=1 // pred_fallthru
      _
    // Predicated region
    $region22: #{tpu_custom_call.1} parent=1 // pred_check
      _
    $region23: #{tpu_custom_call.1} parent=1 // pred_check_branch
      %90 = sbr.rel (0) target = $region25
    $region24: #{tpu_custom_call.1} parent=1 // pred_region
      %92 = dma.done [#allocation4], 1024
    $region25: #{tpu_custom_call.1} parent=1 // pred_fallthru
      _
    %93 = vsyncpa [#allocation3], 1
    %94 = vsyncpa [#allocation6], 1
    %95 = vsyncpa [#allocation4], 1

</llo_original>
